<compile_context>
chip_gen: v6e
topology: v6e:2x2x1
jax: 0.10.0
libtpu: 0.0.40
codegen_flags: <defaults>
</compile_context>

<pallas_src>
import jax
import jax.numpy as jnp
from jax.experimental import pallas as pl
from jax.experimental.pallas import tpu as pltpu


# ----------------------------------------------------------------------------
# Kernel body: z = (x + bias) * scale (broadcasted), computed in f32.
# ----------------------------------------------------------------------------
def _actnorm_fwd_kernel(x_ref, bias_ref, scale_ref, z_ref):
    x = x_ref[...].astype(jnp.float32)
    z_ref[...] = ((x + bias_ref[...]) * scale_ref[...]).astype(z_ref.dtype)


def _round_up(a, b):
    return ((a + b - 1) // b) * b


def _pick_tiles(M, N, itemsize, budget_bytes=2 * 1024 * 1024):
    """Pick (tile_m, tile_n) for an (M, N) slab.

    tile_n is the full lane extent or a multiple of 128; tile_m is the full
    row extent or a multiple of the sublane quantum (8 for 32-bit, 16 for
    16-bit).  Each tile fits `budget_bytes` *after* sublane/lane padding, so
    double-buffered in + out stays ~4x budget (safe at v5e's 16 MiB default
    scoped VMEM).  Tiles are shrunk a little if the grid would have < 4 steps
    so v7x's two TensorCores both get work on large tensors.
    """
    sub = 16 if itemsize == 2 else 8

    # Lane (last-dim) tile.
    if N * itemsize * sub <= budget_bytes:
        tile_n = N                                   # full extent
    else:
        tile_n = max(128, (budget_bytes // (sub * itemsize)) // 128 * 128)
        tile_n = min(tile_n, (N // 128) * 128)

    # Sublane (second-minor) tile.
    rows_budget = max(1, budget_bytes // (max(tile_n, 1) * itemsize))
    if rows_budget >= M:
        tile_m = M                                   # full extent
    else:
        tile_m = max(sub, (rows_budget // sub) * sub)

    # Keep >= 4 grid steps when the data is big enough (megacore on v7x),
    # but never shrink a tile below ~512 KiB (per-step overhead ~0.35 us).
    min_tile_bytes = 512 * 1024
    while True:
        steps = pl.cdiv(M, tile_m) * pl.cdiv(N, tile_n)
        if steps >= 4 or tile_m * tile_n * itemsize <= min_tile_bytes:
            break
        if tile_m > sub:
            new_tm = max(sub, _round_up(tile_m // 2, sub))
            if new_tm < tile_m:
                tile_m = new_tm
                continue
        if tile_n > 128:
            new_tn = max(128, _round_up(tile_n // 2, 128))
            if new_tn < tile_n:
                tile_n = new_tn
                continue
        break
    return tile_m, tile_n, sub


def _actnorm_pallas(x2d, bias2d, scale2d, *, bcast_lanes):
    """x2d: (M, N) in native dtype; bias2d/scale2d: (M,1) or (1,N) f32."""
    M, N = x2d.shape
    itemsize = jnp.dtype(x2d.dtype).itemsize
    tile_m, tile_n, sub = _pick_tiles(M, N, itemsize)
    grid = (pl.cdiv(M, tile_m), pl.cdiv(N, tile_n))

    if bcast_lanes:
        p_block = (1, tile_n)                 # params broadcast over sublanes
        p_map = lambda i, j: (0, j)
    else:
        p_block = (tile_m, 1)                 # params broadcast over lanes
        p_map = lambda i, j: (i, 0)

    # VMEM footprint with sublane/lane padding: double-buffered in + out tiles
    # plus the (tiny) double-buffered param tiles; pass an explicit limit with
    # headroom, clamped to stay safe on every generation (v7x has 64 MiB).
    tm_pad = _round_up(tile_m, sub)
    tn_pad = _round_up(tile_n, 128)
    tile_bytes = tm_pad * tn_pad * itemsize
    if bcast_lanes:
        param_bytes = 8 * tn_pad * 4
    else:
        param_bytes = tm_pad * 128 * 4
    footprint = 4 * tile_bytes + 4 * param_bytes
    vmem_limit = int(min(max(2 * footprint + (4 << 20), 16 << 20), 32 << 20))

    cost = pl.CostEstimate(
        flops=2 * M * N,                                      # add + mul
        bytes_accessed=2 * M * N * itemsize + 2 * bias2d.size * 4,
        transcendentals=0,
    )

    return pl.pallas_call(
        _actnorm_fwd_kernel,
        out_shape=jax.ShapeDtypeStruct((M, N), x2d.dtype),
        grid_spec=pltpu.PrefetchScalarGridSpec(
            num_scalar_prefetch=0,
            grid=grid,
            in_specs=[
                pl.BlockSpec((tile_m, tile_n), lambda i, j: (i, j)),  # x
                pl.BlockSpec(p_block, p_map),                         # bias
                pl.BlockSpec(p_block, p_map),                         # exp(logs)
            ],
            out_specs=pl.BlockSpec((tile_m, tile_n), lambda i, j: (i, j)),
        ),
        compiler_params=pltpu.CompilerParams(
            dimension_semantics=("parallel", "parallel"),
            vmem_limit_bytes=vmem_limit,
        ),
        cost_estimate=cost,
    )(x2d, bias2d, scale2d)


# ----------------------------------------------------------------------------
# Forward wrapper (reverse=False path of the PyTorch module)
# ----------------------------------------------------------------------------
def actnorm_forward(x, bias, logs, ldj=None):
    """x: (B, C, H, W) NCHW (f32 or bf16); bias, logs: (C,) f32.

    Returns (z, ldj) with z in x.dtype.
    """
    # TODO(synk): reverse=True path (x*exp(-logs) - bias, ldj - sum(logs)*H*W)
    # is not kernelized; only the forward (reverse=False) direction is here.
    B, C, H, W = x.shape
    HW = H * W

    bias_f = bias.astype(jnp.float32)
    scale_f = jnp.exp(logs).astype(jnp.float32)

    if HW >= 128:
        # Rows = B*C (sublanes), lanes = HW; per-channel params broadcast
        # across lanes.  Lane axis is the (usually 128-aligned) spatial dim.
        M, N = B * C, HW
        x2d = x.reshape(M, N)
        bias2d = jnp.tile(bias_f, (B,)).reshape(M, 1)
        scale2d = jnp.tile(scale_f, (B,)).reshape(M, 1)
        bcast_lanes = False
    else:
        # Small spatial (late flow levels): keep the lane axis wide by folding
        # C into it; params pre-broadcast along lanes (tiny: C*HW floats).
        M, N = B, C * HW
        x2d = x.reshape(M, N)
        bias2d = jnp.repeat(bias_f, HW).reshape(1, N)
        scale2d = jnp.repeat(scale_f, HW).reshape(1, N)
        bcast_lanes = True

    z2d = _actnorm_pallas(x2d, bias2d, scale2d, bcast_lanes=bcast_lanes)
    z = z2d.reshape(B, C, H, W)

    if ldj is not None:
        # ldj = logs.sum() * H * W  (tiny scalar reduction, plain JAX)
        ldj = ldj + jnp.sum(logs) * jnp.asarray(float(HW), ldj.dtype)
    return z, ldj


# ----------------------------------------------------------------------------
# Data-dependent initialization (mirrors Actnormlayer.initialize_parameters).
# Global mean over (B, H, W) — a tiny reduction, done in plain JAX.
# ----------------------------------------------------------------------------
def actnorm_init_params(x, scale=1.0, eps=1e-6):
    B, C, H, W = x.shape
    xf = x.astype(jnp.float32)
    bias = -jnp.mean(xf, axis=(0, 2, 3))                                  # (C,)
    v = jnp.mean((xf + bias.reshape(1, C, 1, 1)) ** 2, axis=(0, 2, 3))    # (C,)
    logs = jnp.log(scale / (jnp.sqrt(v) + eps))                           # (C,)
    return bias, logs


# ----------------------------------------------------------------------------
if __name__ == "__main__":
    key = jax.random.PRNGKey(0)
    k_x, k_ldj, k_x2 = jax.random.split(key, 3)

    # --- main check: f32, "regime A" (HW >= 128) ---------------------------
    B, C, H, W = 2, 4, 16, 16
    x = jax.random.normal(k_x, (B, C, H, W), dtype=jnp.float32) * 2.0 + 0.5
    ldj_in = jax.random.normal(k_ldj, (B,), dtype=jnp.float32)

    bias, logs = actnorm_init_params(x, scale=1.0)        # data-dependent init
    z, ldj_out = actnorm_forward(x, bias, logs, ldj=ldj_in)
    z = jax.block_until_ready(z)
    ldj_out = jax.block_until_ready(ldj_out)

    z_ref = (x + bias.reshape(1, C, 1, 1)) * jnp.exp(logs).reshape(1, C, 1, 1)
    ldj_ref = ldj_in + jnp.sum(logs) * float(H * W)

    assert z.shape == (B, C, H, W) and z.dtype == x.dtype
    assert jnp.allclose(z, z_ref, atol=1e-5, rtol=1e-5), "actnorm output mismatch"
    assert jnp.allclose(ldj_out, ldj_ref, atol=1e-5, rtol=1e-5), "logdet mismatch"

    # --- bf16 native-dtype streaming check ----------------------------------
    x_bf = x.astype(jnp.bfloat16)
    z_bf, _ = actnorm_forward(x_bf, bias, logs, ldj=None)
    z_bf = jax.block_until_ready(z_bf)
    assert z_bf.dtype == jnp.bfloat16
    assert jnp.allclose(z_bf.astype(jnp.float32), z_ref, atol=5e-2, rtol=5e-2), \
        "bf16 actnorm output mismatch"

    # --- small-spatial "regime B" check (HW < 128) ---------------------------
    B2, C2, H2, W2 = 2, 32, 4, 4
    x2 = jax.random.normal(k_x2, (B2, C2, H2, W2), dtype=jnp.float32)
    bias2, logs2 = actnorm_init_params(x2, scale=1.0)
    z2, _ = actnorm_forward(x2, bias2, logs2, ldj=None)
    z2 = jax.block_until_ready(z2)
    z2_ref = (x2 + bias2.reshape(1, C2, 1, 1)) * jnp.exp(logs2).reshape(1, C2, 1, 1)
    assert jnp.allclose(z2, z2_ref, atol=1e-5, rtol=1e-5), "regime-B output mismatch"

    print("KERNEL_OK")
</pallas_src>

<mosaic_0001>
module attributes {stable_mosaic.version = 11 : i64} {
  func.func @_actnorm_fwd_kernel(%arg0: i32, %arg1: i32, %arg2: memref<8x256xf32, #tpu.memory_space<vmem>>, %arg3: memref<8x1xf32, #tpu.memory_space<vmem>>, %arg4: memref<8x1xf32, #tpu.memory_space<vmem>>, %arg5: memref<8x256xf32, #tpu.memory_space<vmem>>) attributes {dimension_semantics = [#tpu.dimension_semantics<parallel>, #tpu.dimension_semantics<parallel>], iteration_bounds = array<i64: 1, 1>, scalar_prefetch = 0 : i64, scratch_operands = 0 : i64, tpu.core_type = #tpu.core_type<tc>, window_params = [{transform_indices = @transform_0, window_bounds = array<i64: 8, 256>}, {transform_indices = @transform_1, window_bounds = array<i64: 8, 1>}, {transform_indices = @transform_2, window_bounds = array<i64: 8, 1>}, {transform_indices = @transform_3, window_bounds = array<i64: 8, 256>}]} {
    %c0 = arith.constant 0 : index
    %c0_0 = arith.constant 0 : index
    %0 = vector.load %arg2[%c0, %c0_0] : memref<8x256xf32, #tpu.memory_space<vmem>>, vector<8x256xf32>
    %c0_1 = arith.constant 0 : index
    %c0_2 = arith.constant 0 : index
    %1 = vector.load %arg3[%c0_1, %c0_2] : memref<8x1xf32, #tpu.memory_space<vmem>>, vector<8x1xf32>
    %2 = vector.broadcast %1 : vector<8x1xf32> to vector<8x256xf32>
    %3 = arith.addf %0, %2 : vector<8x256xf32>
    %c0_3 = arith.constant 0 : index
    %c0_4 = arith.constant 0 : index
    %4 = vector.load %arg4[%c0_3, %c0_4] : memref<8x1xf32, #tpu.memory_space<vmem>>, vector<8x1xf32>
    %5 = vector.broadcast %4 : vector<8x1xf32> to vector<8x256xf32>
    %6 = arith.mulf %3, %5 : vector<8x256xf32>
    %c0_5 = arith.constant 0 : index
    %c0_6 = arith.constant 0 : index
    %7 = vector.load %arg5[%c0_5, %c0_6] : memref<8x256xf32, #tpu.memory_space<vmem>>, vector<8x256xf32>
    tpu.vector_store %arg5[%c0_5, %c0_6], %6 {strides = array<i32>} : memref<8x256xf32, #tpu.memory_space<vmem>>, vector<8x256xf32>,
    return
  }
  func.func @transform_0(%arg0: i32, %arg1: i32) -> (i32, i32) {
    %c0_i32 = arith.constant 0 : i32
    return %arg0, %arg1 : i32, i32
  }
  func.func @transform_1(%arg0: i32, %arg1: i32) -> (i32, i32) {
    %c0_i32 = arith.constant 0 : i32
    %c0_i32_0 = arith.constant 0 : i32
    return %arg0, %c0_i32 : i32, i32
  }
  func.func @transform_2(%arg0: i32, %arg1: i32) -> (i32, i32) {
    %c0_i32 = arith.constant 0 : i32
    %c0_i32_0 = arith.constant 0 : i32
    return %arg0, %c0_i32 : i32, i32
  }
  func.func @transform_3(%arg0: i32, %arg1: i32) -> (i32, i32) {
    %c0_i32 = arith.constant 0 : i32
    return %arg0, %arg1 : i32, i32
  }
}

</mosaic_0001>

<llo_original>
// kernel: tpu_custom_call.1
$region0: #{tpu_custom_call.1}
  #allocation0 [shape = 'u32[]', space=smem, size = 0x4, offset = 0x4, fixed_abs, tag = 'smem constant byte address 0x4 - core index']
  #allocation1 [shape = 'u32[144,128]{1,0:T(1,128)}', space=vmem, size = 0x12000, scoped, tag = 'internal scratch']
  %s0 = inlined_call_operand.vmem [shape: f32[8,256], index: 0, kind: input, shape index: {}]
  %s1 = inlined_call_operand.vmem [shape: f32[8,1], index: 1, kind: input, shape index: {}]
  %s2 = inlined_call_operand.vmem [shape: f32[8,1], index: 2, kind: input, shape index: {}]
  %s3 = inlined_call_operand.hbm [shape: f32[8,256], index: 3, kind: output, shape index: {}]
  %s4 = sld [smem:[#allocation0]]
  $region22: #{tpu_custom_call.1} parent=0
    _
  %s6 = ssub.s32 1, %s4
  %s7 = scalar_select 0, %s6, %s4
  $region1: #{tpu_custom_call.1} parent=0
    #allocation2 [shape = 'u8[8192]{0}', space=vmem, size = 0x2000, scoped, tag = 'output window, operand 0, single buffered']
    #allocation3 [shape = 's32[1]{0}', space=sflag, size = 0x4, scoped, tag = 'scoped memory for tpu_custom_call.1']
    %8 = vsyncpa [#allocation3], 0
    // Predicated region
    $region2: #{tpu_custom_call.1} parent=1 // pred_check
      _
    $region3: #{tpu_custom_call.1} parent=1 // pred_check_branch
      %10 = sbr.rel (0) target = $region5
    $region4: #{tpu_custom_call.1} parent=1 // pred_region
      _
    $region5: #{tpu_custom_call.1} parent=1 // pred_fallthru
      _
    // Predicated region
    $region6: #{tpu_custom_call.1} parent=1 // pred_check
      _
    $region7: #{tpu_custom_call.1} parent=1 // pred_check_branch
      %12 = sbr.rel (0) target = $region9
    $region8: #{tpu_custom_call.1} parent=1 // pred_region
      _
    $region9: #{tpu_custom_call.1} parent=1 // pred_fallthru
      _
    // Predicated region
    $region10: #{tpu_custom_call.1} parent=1 // pred_check
      _
    $region11: #{tpu_custom_call.1} parent=1 // pred_check_branch
      %14 = sbr.rel (0) target = $region13
    $region12: #{tpu_custom_call.1} parent=1 // pred_region
      _
    $region13: #{tpu_custom_call.1} parent=1 // pred_fallthru
      _
    %v15 = vld [vmem:[%s0] sm:$0xff]
    %v16 = vld [vmem:[%s0 + $0x8] sm:$0xff]
    %v17 = vld [vmem:[%s1] sm:$0xff]
    %19 = vset.pattern.permute.xlu0 0
    %20 = vperm.xlu0 %19, %v17
    %v21 = vpop.permute.xlu0 %20
    %v23 = vadd.f32 %v15, %v21
    %v24 = vadd.f32 %v16, %v21
    %v25 = vld [vmem:[%s2] sm:$0xff]
    %27 = vset.pattern.permute.xlu0 0
    %28 = vperm.xlu0 %27, %v25
    %v29 = vpop.permute.xlu0 %28
    %v31 = vmul.f32 %v23, %v29
    %v32 = vmul.f32 %v24, %v29
    %33 = vst [vmem:[#allocation2] sm:$0xff] %v31
    %34 = vst [vmem:[#allocation2 + $0x8] sm:$0xff] %v32
    // Predicated region
    $region14: #{tpu_custom_call.1} parent=1 // pred_check
      _
    $region15: #{tpu_custom_call.1} parent=1 // pred_check_branch
      %36 = sbr.rel (0) target = $region17
    $region16: #{tpu_custom_call.1} parent=1 // pred_region
      %s38 = ssub.s32 256, 256
      %39 = vsyncadd [#allocation3], %s38
      %s41 = sshll.u32 [#allocation2], 4
      %s42 = int_to_ptr.vmem [resolvable:$true] %s41
      %44 = dma.vmem_to_hbm [thread:$0]  %s42, 256, %s3, [#allocation3]
    $region17: #{tpu_custom_call.1} parent=1 // pred_fallthru
      _
    // Predicated region
    $region18: #{tpu_custom_call.1} parent=1 // pred_check
      _
    $region19: #{tpu_custom_call.1} parent=1 // pred_check_branch
      %46 = sbr.rel (0) target = $region21
    $region20: #{tpu_custom_call.1} parent=1 // pred_region
      %47 = dma.done [#allocation3], 256
    $region21: #{tpu_custom_call.1} parent=1 // pred_fallthru
      _
    %48 = vsyncpa [#allocation3], 1

</llo_original>
